<compile_context>
chip_gen: v5e
topology: v5e:2x2
jax: 0.10.0
libtpu: 0.0.40
codegen_flags: <defaults>
</compile_context>

<pallas_src>
import functools

import numpy as np
import jax
import jax.numpy as jnp
from jax.experimental import pallas as pl
from jax.experimental.pallas import tpu as pltpu


def _round_up(x, m):
    return (x + m - 1) // m * m


# ----------------------------------------------------------------------------
# In-kernel MLP chain: Linear -> ReLU -> ... -> Linear.
# wb = (w0, b0, w1, b1, ...); weights stored [in, out], biases [1, out].
# Matmul operands run in their native dtype (optionally overridden, e.g. bf16
# on v5e) with f32 accumulation on the MXU; returns an f32 result.
def _apply_mlp(h, wb, num_linear, operand_dtype):
    for layer in range(num_linear):
        w = wb[2 * layer][...]
        b = wb[2 * layer + 1][...]
        lhs_dtype = w.dtype if operand_dtype is None else operand_dtype
        h = jnp.dot(h.astype(lhs_dtype), w.astype(lhs_dtype),
                    preferred_element_type=jnp.float32) + b
        if layer < num_linear - 1:
            h = jnp.maximum(h, 0.0).astype(lhs_dtype)
    return h


# ----------------------------------------------------------------------------
# Path 1: identity interpolation (H_s == H_t): CLS-drop + MLP only.
# No one-hot gather matmul; the resident (N, C_s) block is sliced in VMEM.
def _slice_mlp_kernel(num_linear, cls_off, row_tile, operand_dtype,
                      x_ref, *refs):
    o_ref = refs[-1]
    wb = refs[:-1]
    r = pl.program_id(1)
    if cls_off == 0 and row_tile % 8 == 0:
        start = pl.multiple_of(r * row_tile, 8)
    else:
        start = cls_off + r * row_tile        # one-sublane misalignment is OK
    h = x_ref[pl.ds(start, row_tile), :]
    o_ref[...] = _apply_mlp(h, wb, num_linear, operand_dtype).astype(o_ref.dtype)


# ----------------------------------------------------------------------------
# Path 2: downsampling -- fused CLS-drop + nearest gather FIRST (fewer rows
# enter the MLP), then the MLP.  The gather is a one-hot selection matrix
# built from iota+compare (zero HBM traffic) applied on the MXU; accumulation
# in the native dtype is exact for a one-hot matmul.
def _gather_first_kernel(num_linear, n_src_rows, operand_dtype,
                         src_ref, x_ref, *refs):
    o_ref = refs[-1]
    wb = refs[:-1]
    ids = src_ref[...]                                              # (rt, 1) i32
    col = jax.lax.broadcasted_iota(jnp.int32, (ids.shape[0], n_src_rows), 1)
    sel = (col == ids).astype(x_ref.dtype)                          # (rt, N)
    h = jnp.dot(sel, x_ref[...], preferred_element_type=x_ref.dtype)
    o_ref[...] = _apply_mlp(h, wb, num_linear, operand_dtype).astype(o_ref.dtype)


# ----------------------------------------------------------------------------
# Path 3: upsampling -- the row-wise MLP commutes with nearest-neighbor row
# duplication, so run the MLP ONCE per batch over the H_s*W_s source tokens
# (at r == 0, into a persistent VMEM scratch) and apply the one-hot gather to
# the (rt, C_t) result.  Requires the r grid axis to be "arbitrary"
# (sequential per batch, single core).
def _mlp_first_kernel(num_linear, cls_off, n_src_tokens, operand_dtype,
                      src_ref, x_ref, *refs):
    o_ref = refs[-2]
    mlp_scratch = refs[-1]             # (S, C_t), persistent across the r axis
    wb = refs[:-2]

    @pl.when(pl.program_id(1) == 0)
    def _():
        src = x_ref[pl.ds(cls_off, n_src_tokens), :]                # (S, C_s)
        mlp_scratch[...] = _apply_mlp(src, wb, num_linear,
                                      operand_dtype).astype(mlp_scratch.dtype)

    ids = src_ref[...]                                   # (rt, 1) i32 in [0, S)
    col = jax.lax.broadcasted_iota(jnp.int32, (ids.shape[0], n_src_tokens), 1)
    sel = (col == ids).astype(mlp_scratch.dtype)                    # (rt, S)
    o_ref[...] = jnp.dot(sel, mlp_scratch[...],
                         preferred_element_type=mlp_scratch.dtype
                         ).astype(o_ref.dtype)


# --------------------------- module-level wrapper ----------------------------
def mlp_adapter_head_forward(x, weights, biases, source_size, target_size,
                             backbone_no_cls=False, *,
                             max_row_tile=256, mlp_operand_dtype=None):
    """JAX/Pallas equivalent of MLPAdapterHead.forward.

    x: [B, N, C_s]; weights[i]: [in, out] (pre-transposed for x @ W),
    biases[i]: [1, out]; source_size=(C_s,H_s,W_s); target_size=(C_t,H_t,W_t).
    mlp_operand_dtype: optionally run the MLP matmul operands narrower
        (e.g. jnp.bfloat16 on v5e); accumulation stays f32.
    max_row_tile: 256 is safe on v7x (64 MiB VMEM); use 512 on v5e/v6e.
    """
    C_s, H_s, W_s = source_size
    B, N, C_in = x.shape
    assert C_in == C_s
    _, H_t, W_t = target_size
    cls_off = 0 if backbone_no_cls else 1
    S = H_s * W_s
    assert N - cls_off == S, "token count must match source spatial size"

    num_linear = len(weights)
    C_out = weights[-1].shape[1]
    act_dtype = x.dtype
    itemsize = jnp.dtype(act_dtype).itemsize

    # ---- spatial mapping (trace time, tiny) --------------------------------
    if H_s != H_t:                     # matches the module's gating condition
        # torch interpolate mode='nearest' (legacy floor): src = dst*in//out
        hi = (np.arange(H_t) * H_s) // H_t
        wi = (np.arange(W_t) * W_s) // W_t
        src_tok = (hi[:, None] * W_s + wi[None, :]).reshape(-1)     # in [0, S)
        T_out = H_t * W_t
        resize = True
    else:
        # TODO(synk): module keeps SOURCE spatial size when H_s == H_t even if
        # W_s != W_t (identity interpolation) -- reproduced faithfully; output
        # spatial size is then H_s*W_s, not H_t*W_t.
        src_tok = np.arange(S)
        T_out = S
        resize = False

    # ---- choose gather/MLP order by FLOPs ----------------------------------
    mlp_dims = [C_s] + [w.shape[1] for w in weights]
    mlp_flops_row = sum(2 * a * b for a, b in zip(mlp_dims[:-1], mlp_dims[1:]))
    gather_first_flops = T_out * 2 * N * C_s + T_out * mlp_flops_row
    mlp_first_flops = S * mlp_flops_row + T_out * 2 * S * C_out
    if not resize:
        mode = "slice"                 # no gather at all (may fall back below)
    elif mlp_first_flops < gather_first_flops:
        mode = "mlp_first"             # upsampling: MLP once on source tokens
    else:
        mode = "gather_first"          # downsampling: gather first, then MLP

    # ---- weights stay fully VMEM-resident; single-buffer them only when they
    #      are big enough to actually pressure VMEM (constant index_map =>
    #      double buffering is pure waste, matters inside v7x's 64 MiB) ------
    wb_bytes = sum(int(np.prod(w.shape)) * w.dtype.itemsize +
                   int(np.prod(b_.shape)) * b_.dtype.itemsize
                   for w, b_ in zip(weights, biases))
    single_buffer_wb = wb_bytes > (2 << 20)
    wb_buffers = 1 if single_buffer_wb else 2

    # ---- row tile + VMEM budget, re-derived from real shapes ----------------
    h_max = max(mlp_dims)

    def vmem_estimate(rt):
        xb = 2 * N * C_s * itemsize                  # resident image, 2 bufs
        wbytes = wb_buffers * wb_bytes
        ob = 2 * rt * C_out * itemsize               # output tile, 2 bufs
        ib = 2 * rt * 4                              # index-table tile
        if mode == "mlp_first":
            tmp = (S * C_out * itemsize              # persistent MLP scratch
                   + 2 * S * h_max * 4               # f32 MLP intermediates
                   + rt * S * itemsize)              # one-hot gather matrix
        elif mode == "gather_first":
            tmp = rt * N * itemsize + 2 * rt * h_max * 4
        else:
            tmp = 2 * rt * h_max * 4
        return xb + wbytes + ob + ib + tmp

    VMEM_BUDGET = 40 << 20                           # conservative vs v7x 64 MiB
    row_tile = T_out if T_out <= max_row_tile else _round_up(max_row_tile, 8)
    while row_tile > 8 and vmem_estimate(row_tile) > VMEM_BUDGET:
        row_tile = max(8, _round_up(row_tile // 2, 8))
    r_tiles = pl.cdiv(T_out, row_tile)
    padded_rows = r_tiles * row_tile

    # The slice path needs every tile fully in-bounds; on a ragged tiling fall
    # back to the (index-clamped) gather path instead of reading OOB VMEM.
    if mode == "slice" and padded_rows != T_out:
        mode = "gather_first"

    vmem_limit = int(min(48 << 20,
                         max(32 << 20, vmem_estimate(row_tile) + (8 << 20))))

    # ---- per-output-row source-token index table (tiny, trace time).
    #      Ragged tail rows are clamped to a VALID index so the kernel never
    #      consumes garbage; Pallas drops those output rows at the store. ----
    idx_arr = None
    if mode != "slice":
        idx = src_tok if mode == "mlp_first" else (cls_off + src_tok)
        idx = np.pad(idx, (0, padded_rows - T_out),
                     constant_values=int(idx[0]) if T_out else 0)
        idx_arr = jnp.asarray(idx, jnp.int32).reshape(padded_rows, 1)

    # ---- BlockSpecs ----------------------------------------------------------
    def _const_spec(shape):
        if single_buffer_wb:
            return pl.BlockSpec(shape, lambda b, r: (0, 0),
                                pipeline_mode=pl.Buffered(1))
        return pl.BlockSpec(shape, lambda b, r: (0, 0))

    # full token matrix of image b, same block across r => one DMA per batch
    x_spec = pl.BlockSpec((None, N, C_s), lambda b, r: (b, 0, 0))
    idx_spec = pl.BlockSpec((row_tile, 1), lambda b, r: (r, 0))
    # TODO(synk): when C_t < 128 a transposed / lane-dense output layout would
    # avoid masked vst on the store path; kept row-major to match the module's
    # [B, T, C_t] layout without an extra XLA transpose round-trip.
    out_spec = pl.BlockSpec((None, row_tile, C_out), lambda b, r: (b, r, 0))

    wb_specs, wb_args = [], []
    for w, b_ in zip(weights, biases):
        wb_specs += [_const_spec(w.shape), _const_spec(b_.shape)]
        wb_args += [w, b_]

    scratch_shapes = []
    if mode == "slice":
        kernel = functools.partial(_slice_mlp_kernel, num_linear, cls_off,
                                   row_tile, mlp_operand_dtype)
        in_specs = [x_spec] + wb_specs
        args = [x] + wb_args
    elif mode == "gather_first":
        kernel = functools.partial(_gather_first_kernel, num_linear, N,
                                   mlp_operand_dtype)
        in_specs = [idx_spec, x_spec] + wb_specs
        args = [idx_arr, x] + wb_args
    else:  # mlp_first
        kernel = functools.partial(_mlp_first_kernel, num_linear, cls_off, S,
                                   mlp_operand_dtype)
        in_specs = [idx_spec, x_spec] + wb_specs
        args = [idx_arr, x] + wb_args
        scratch_shapes = [pltpu.VMEM((S, C_out), act_dtype)]

    return pl.pallas_call(
        kernel,
        out_shape=jax.ShapeDtypeStruct((B, T_out, C_out), act_dtype),
        grid_spec=pltpu.PrefetchScalarGridSpec(
            num_scalar_prefetch=0,
            grid=(B, r_tiles),
            in_specs=in_specs,
            out_specs=out_spec,
            scratch_shapes=scratch_shapes,
        ),
        compiler_params=pltpu.CompilerParams(
            # B ("parallel") shards across v7x's two TensorCores; r must stay
            # "arbitrary": the resident image and the r==0 MLP scratch assume
            # sequential r iteration on one core (measured ~free anyway).
            dimension_semantics=("parallel", "arbitrary"),
            vmem_limit_bytes=vmem_limit,
        ),
    )(*args)


# ----------------------------- param construction ---------------------------
def init_mlp_adapter_params(key, source_channels, target_channels, num_layer,
                            dtype=jnp.float32):
    """Deterministic nn.Linear-style init (uniform +-1/sqrt(fan_in)).
    Weights are stored as [in, out] (already transposed for x @ W)."""
    assert num_layer >= 1
    if num_layer == 1:
        dims = [source_channels, target_channels]
    else:
        hidden = source_channels * 2
        dims = [source_channels] + [hidden] * (num_layer - 1) + [target_channels]

    weights, biases = [], []
    for i in range(len(dims) - 1):
        fan_in, fan_out = dims[i], dims[i + 1]
        key, kw, kb = jax.random.split(key, 3)
        bound = 1.0 / (fan_in ** 0.5)
        weights.append(jax.random.uniform(kw, (fan_in, fan_out), dtype,
                                          minval=-bound, maxval=bound))
        biases.append(jax.random.uniform(kb, (1, fan_out), dtype,
                                         minval=-bound, maxval=bound))
    return weights, biases


# ---------------------------------- main -------------------------------------
if __name__ == "__main__":
    def ref_forward(x, weights, biases, source_size, target_size,
                    backbone_no_cls=False):
        C_s, H_s, W_s = source_size
        _, H_t, W_t = target_size
        if not backbone_no_cls:
            x = x[:, 1:]
        Bb = x.shape[0]
        if H_s != H_t:
            xr = x.reshape(Bb, H_s, W_s, C_s)
            hi = (jnp.arange(H_t) * H_s) // H_t
            wi = (jnp.arange(W_t) * W_s) // W_t
            x = xr[:, hi][:, :, wi].reshape(Bb, H_t * W_t, C_s)
        h = x
        for li, (w, b) in enumerate(zip(weights, biases)):
            h = h @ w + b
            if li < len(weights) - 1:
                h = jnp.maximum(h, 0.0)
        return h

    key = jax.random.PRNGKey(0)
    B = 2
    configs = [
        # (source_size, target_size, num_layer) -- exercises all three paths
        ((32, 8, 8), (16, 4, 4), 2),   # downsample  -> gather-first kernel
        ((32, 4, 4), (16, 8, 8), 2),   # upsample    -> MLP-first kernel
        ((32, 4, 4), (16, 4, 4), 1),   # same size   -> identity / slice kernel
    ]
    for source_size, target_size, num_layer in configs:
        key, kx, kp = jax.random.split(key, 3)
        N = 1 + source_size[1] * source_size[2]       # CLS + patch tokens
        x = jax.random.normal(kx, (B, N, source_size[0]), jnp.float32)
        weights, biases = init_mlp_adapter_params(
            kp, source_size[0], target_size[0], num_layer)

        out = jax.block_until_ready(
            mlp_adapter_head_forward(x, weights, biases, source_size,
                                     target_size, backbone_no_cls=False))
        ref = ref_forward(x, weights, biases, source_size, target_size)
        assert out.shape == ref.shape, (out.shape, ref.shape)
        assert jnp.allclose(out, ref, atol=2e-5, rtol=2e-5), \
            f"mismatch for {source_size} -> {target_size}"

    print("KERNEL_OK")
</pallas_src>

<mosaic_0001>
module attributes {stable_mosaic.version = 11 : i64} {
  func.func @_gather_first_kernel(%arg0: i32, %arg1: i32, %arg2: memref<16x1xi32, #tpu.memory_space<vmem>>, %arg3: memref<1x65x32xf32, #tpu.memory_space<vmem>>, %arg4: memref<32x64xf32, #tpu.memory_space<vmem>>, %arg5: memref<1x64xf32, #tpu.memory_space<vmem>>, %arg6: memref<64x16xf32, #tpu.memory_space<vmem>>, %arg7: memref<1x16xf32, #tpu.memory_space<vmem>>, %arg8: memref<1x16x16xf32, #tpu.memory_space<vmem>>) attributes {dimension_semantics = [#tpu.dimension_semantics<parallel>, #tpu.dimension_semantics<arbitrary>], iteration_bounds = array<i64: 2, 1>, scalar_prefetch = 0 : i64, scratch_operands = 0 : i64, tpu.core_type = #tpu.core_type<tc>, window_params = [{transform_indices = @transform_0, window_bounds = array<i64: 16, 1>}, {transform_indices = @transform_1, window_bounds = array<i64: 1, 65, 32>}, {pipeline_mode = #tpu.pipeline_mode<synchronous>, transform_indices = @transform_2, window_bounds = array<i64: 32, 64>}, {pipeline_mode = #tpu.pipeline_mode<synchronous>, transform_indices = @transform_3, window_bounds = array<i64: 1, 64>}, {pipeline_mode = #tpu.pipeline_mode<synchronous>, transform_indices = @transform_4, window_bounds = array<i64: 64, 16>}, {pipeline_mode = #tpu.pipeline_mode<synchronous>, transform_indices = @transform_5, window_bounds = array<i64: 1, 16>}, {transform_indices = @transform_6, window_bounds = array<i64: 1, 16, 16>}]} {
    %c0 = arith.constant 0 : index
    %c0_0 = arith.constant 0 : index
    %0 = vector.load %arg2[%c0, %c0_0] : memref<16x1xi32, #tpu.memory_space<vmem>>, vector<16x1xi32>
    %1 = tpu.iota {dimensions = array<i32: 1>} : vector<16x65xi32>
    %2 = vector.broadcast %0 : vector<16x1xi32> to vector<16x65xi32>
    %3 = arith.cmpi eq, %1, %2 : vector<16x65xi32>
    %4 = arith.extui %3 : vector<16x65xi1> to vector<16x65xi32>
    %5 = arith.sitofp %4 : vector<16x65xi32> to vector<16x65xf32>
    %c0_1 = arith.constant 0 : index
    %c0_2 = arith.constant 0 : index
    %c0_3 = arith.constant 0 : index
    %6 = vector.load %arg3[%c0_1, %c0_2, %c0_3] : memref<1x65x32xf32, #tpu.memory_space<vmem>>, vector<1x65x32xf32>
    %7 = vector.shape_cast %6 : vector<1x65x32xf32> to vector<65x32xf32>
    %cst = arith.constant dense<0.000000e+00> : vector<16x32xf32>
    %8 = tpu.matmul %5, %7, %cst {dimension_numbers = #tpu.dot_dimension_numbers<[1], [0], [0], [1], [0, 0, 1, 1], [], []>} : vector<16x65xf32>, vector<65x32xf32>, vector<16x32xf32> -> vector<16x32xf32>
    %c0_4 = arith.constant 0 : index
    %c0_5 = arith.constant 0 : index
    %9 = vector.load %arg4[%c0_4, %c0_5] : memref<32x64xf32, #tpu.memory_space<vmem>>, vector<32x64xf32>
    %c0_6 = arith.constant 0 : index
    %c0_7 = arith.constant 0 : index
    %10 = vector.load %arg5[%c0_6, %c0_7] : memref<1x64xf32, #tpu.memory_space<vmem>>, vector<1x64xf32>
    %cst_8 = arith.constant dense<0.000000e+00> : vector<16x64xf32>
    %11 = tpu.matmul %8, %9, %cst_8 {dimension_numbers = #tpu.dot_dimension_numbers<[1], [0], [0], [1], [0, 0, 1, 1], [], []>} : vector<16x32xf32>, vector<32x64xf32>, vector<16x64xf32> -> vector<16x64xf32>
    %12 = vector.broadcast %10 : vector<1x64xf32> to vector<16x64xf32>
    %13 = arith.addf %11, %12 : vector<16x64xf32>
    %cst_9 = arith.constant 0.000000e+00 : f32
    %14 = vector.broadcast %cst_9 : f32 to vector<16x64xf32>
    %15 = arith.maximumf %13, %14 : vector<16x64xf32>
    %c0_10 = arith.constant 0 : index
    %c0_11 = arith.constant 0 : index
    %16 = vector.load %arg6[%c0_10, %c0_11] : memref<64x16xf32, #tpu.memory_space<vmem>>, vector<64x16xf32>
    %c0_12 = arith.constant 0 : index
    %c0_13 = arith.constant 0 : index
    %17 = vector.load %arg7[%c0_12, %c0_13] : memref<1x16xf32, #tpu.memory_space<vmem>>, vector<1x16xf32>
    %cst_14 = arith.constant dense<0.000000e+00> : vector<16x16xf32>
    %18 = tpu.matmul %15, %16, %cst_14 {dimension_numbers = #tpu.dot_dimension_numbers<[1], [0], [0], [1], [0, 0, 1, 1], [], []>} : vector<16x64xf32>, vector<64x16xf32>, vector<16x16xf32> -> vector<16x16xf32>
    %19 = vector.broadcast %17 : vector<1x16xf32> to vector<16x16xf32>
    %20 = arith.addf %18, %19 : vector<16x16xf32>
    %c0_15 = arith.constant 0 : index
    %c0_16 = arith.constant 0 : index
    %c0_17 = arith.constant 0 : index
    %21 = vector.load %arg8[%c0_15, %c0_16, %c0_17] : memref<1x16x16xf32, #tpu.memory_space<vmem>>, vector<1x16x16xf32>
    %22 = vector.shape_cast %21 : vector<1x16x16xf32> to vector<16x16xf32>
    %23 = vector.shape_cast %20 : vector<16x16xf32> to vector<1x16x16xf32>
    tpu.vector_store %arg8[%c0_15, %c0_16, %c0_17], %23 {strides = array<i32>} : memref<1x16x16xf32, #tpu.memory_space<vmem>>, vector<1x16x16xf32>,
    return
  }
  func.func @transform_0(%arg0: i32, %arg1: i32) -> (i32, i32) {
    %c0_i32 = arith.constant 0 : i32
    %c0_i32_0 = arith.constant 0 : i32
    return %arg1, %c0_i32 : i32, i32
  }
  func.func @transform_1(%arg0: i32, %arg1: i32) -> (i32, i32, i32) {
    %c0_i32 = arith.constant 0 : i32
    %c0_i32_0 = arith.constant 0 : i32
    %c0_i32_1 = arith.constant 0 : i32
    return %arg0, %c0_i32, %c0_i32_0 : i32, i32, i32
  }
  func.func @transform_2(%arg0: i32, %arg1: i32) -> (i32, i32) {
    %c0_i32 = arith.constant 0 : i32
    %c0_i32_0 = arith.constant 0 : i32
    %c0_i32_1 = arith.constant 0 : i32
    return %c0_i32, %c0_i32_0 : i32, i32
  }
  func.func @transform_3(%arg0: i32, %arg1: i32) -> (i32, i32) {
    %c0_i32 = arith.constant 0 : i32
    %c0_i32_0 = arith.constant 0 : i32
    %c0_i32_1 = arith.constant 0 : i32
    return %c0_i32, %c0_i32_0 : i32, i32
  }
  func.func @transform_4(%arg0: i32, %arg1: i32) -> (i32, i32) {
    %c0_i32 = arith.constant 0 : i32
    %c0_i32_0 = arith.constant 0 : i32
    %c0_i32_1 = arith.constant 0 : i32
    return %c0_i32, %c0_i32_0 : i32, i32
  }
  func.func @transform_5(%arg0: i32, %arg1: i32) -> (i32, i32) {
    %c0_i32 = arith.constant 0 : i32
    %c0_i32_0 = arith.constant 0 : i32
    %c0_i32_1 = arith.constant 0 : i32
    return %c0_i32, %c0_i32_0 : i32, i32
  }
  func.func @transform_6(%arg0: i32, %arg1: i32) -> (i32, i32, i32) {
    %c0_i32 = arith.constant 0 : i32
    %c0_i32_0 = arith.constant 0 : i32
    return %arg0, %arg1, %c0_i32 : i32, i32, i32
  }
}

</mosaic_0001>

<llo_original>
// kernel: tpu_custom_call.1
$region0: #{tpu_custom_call.1}
  #allocation0 [shape = 'u32[]', space=smem, size = 0x4, offset = 0x4, fixed_abs, tag = 'smem constant byte address 0x4 - core index']
  #allocation1 [shape = 'u32[72,128]{1,0:T(1,128)}', space=vmem, size = 0x9000, scoped, tag = 'internal scratch']
  %s0 = inlined_call_operand.vmem [shape: s32[16,1], index: 0, kind: input, shape index: {}]
  %s1 = inlined_call_operand.vmem [shape: f32[2,65,32], index: 1, kind: input, shape index: {}]
  %s2 = inlined_call_operand.vmem [shape: f32[32,64], index: 2, kind: input, shape index: {}]
  %s3 = inlined_call_operand.vmem [shape: f32[1,64], index: 3, kind: input, shape index: {}]
  %s4 = inlined_call_operand.vmem [shape: f32[64,16], index: 4, kind: input, shape index: {}]
  %s5 = inlined_call_operand.vmem [shape: f32[1,16], index: 5, kind: input, shape index: {}]
  %s6 = inlined_call_operand.hbm [shape: f32[2,16,16], index: 6, kind: output, shape index: {}]
  %s7 = sld [smem:[#allocation0]]
  $region57: #{tpu_custom_call.1} parent=0
    _
  %s9 = ssub.s32 1, %s7
  %s10 = scalar_select 0, %s9, %s7
  $region1: #{tpu_custom_call.1} parent=0
    #allocation2 [shape = 'u8[16384]{0}', space=vmem, size = 0x4000, scoped, tag = 'output window, operand 0']
    #allocation3 [shape = 's32[2]{0}', space=sflag, size = 0x8, scoped, tag = 'scoped memory for tpu_custom_call.1']
    %11 = vsyncpa [#allocation3], 0
    %s12 = scalar_lea.sflag [#allocation3], 1
    %13 = vsyncpa %s12, 0
    loop: start=0, step=1, limit=4
    $region2: #{tpu_custom_call.1} parent=1 // loop_pre_header
      _
    $region3: #{tpu_custom_call.1} parent=1 // loop_header
      %s15 = sphi 0, %s19
      %p16 = scmp.ge.s32.totalorder %s15, 4
      %s22 = sphi 0, %s34
      %s23 = sphi 0, %s30
      %s24 = sphi 0, %s22
      %s25 = sphi 0, %s23
      %s26 = sphi 0, %s24
      %s27 = sphi 0, %s25
      %s37 = sphi 0, %s39
      %s40 = sphi 0, %s37
      %s41 = sphi 0, %s40
      %s57 = sphi 0, %s41
      %s63 = sphi 0, %s65
      %s66 = sphi 0, %s63
      %s67 = sphi 0, %s66
      %s83 = sphi 0, %s67
      %s87 = sphi 0, %s87
      %s89 = sphi 0, %s87
      %s90 = sphi 0, %s89
      %s104 = sphi 0, %s90
      %s108 = sphi 0, %s108
      %s110 = sphi 0, %s108
      %s111 = sphi 0, %s110
      %s125 = sphi 0, %s111
      %s129 = sphi 0, %s129
      %s131 = sphi 0, %s129
      %s132 = sphi 0, %s131
      %s146 = sphi 0, %s132
      %s150 = sphi 0, %s150
      %s152 = sphi 0, %s150
      %s153 = sphi 0, %s152
      %s167 = sphi 0, %s153
      %s175 = sphi 0, %s177
      %s178 = sphi 0, %s175
      %s179 = sphi 0, %s178
      %s195 = sphi 0, %s179
    $region4: #{tpu_custom_call.1} parent=1 // loop_header_branch
      %18 = sbr.rel (%p16) target = $region8
    $region5: #{tpu_custom_call.1} parent=1 // loop_body
      %s20 = ssub.s32 %s15, 1
      %s21 = ssub.s32 %s15, 2
      %s28 = sadd.s32 1, %s23
      %p29 = scmp.ge.s32.totalorder %s28, 1
      %s30 = scalar_select %p29, 0, %s28
      %s31 = sadd.s32 1, %s22
      %s32 = scalar_select %p29, %s31, %s22
      %p33 = scmp.ge.s32.totalorder %s32, 2
      %s34 = scalar_select %p33, 0, %s32
      %s35 = ssub.s32 %s23, %s30
      %p36 = scmp.eq.s32.totalorder %s35, 0
      %s38 = sadd.s32 %s37, 1
      %s39 = scalar_select %p36, %s37, %s38
      %p42 = pneg %p36
      %p43 = scmp.eq.s32.totalorder %s15, 1
      %p44 = por %p42, %p43
      %p45 = scmp.ne.s32.totalorder %s37, %s40
      %p46 = scmp.eq.s32.totalorder %s15, 0
      %p47 = por %p45, %p46
      %p48 = scmp.ne.s32.totalorder %s37, %s40
      %p49 = scmp.eq.s32.totalorder %s20, 1
      %p50 = por %p48, %p49
      %p51 = scmp.ne.s32.totalorder %s40, %s41
      %p52 = scmp.eq.s32.totalorder %s20, 0
      %p53 = por %p51, %p52
      %p54 = scmp.ne.s32.totalorder %s40, %s41
      %p55 = scmp.eq.s32.totalorder %s21, 1
      %p56 = por %p54, %p55
      %p58 = scmp.ne.s32.totalorder %s41, %s57
      %p59 = scmp.eq.s32.totalorder %s21, 0
      %p60 = por %p58, %p59
      %s61 = ssub.s32 %s22, %s34
      %p62 = scmp.eq.s32.totalorder %s61, 0
      %s64 = sadd.s32 %s63, 1
      %s65 = scalar_select %p62, %s63, %s64
      %p68 = pneg %p62
      %p69 = scmp.eq.s32.totalorder %s15, 1
      %p70 = por %p68, %p69
      %p71 = scmp.ne.s32.totalorder %s63, %s66
      %p72 = scmp.eq.s32.totalorder %s15, 0
      %p73 = por %p71, %p72
      %p74 = scmp.ne.s32.totalorder %s63, %s66
      %p75 = scmp.eq.s32.totalorder %s20, 1
      %p76 = por %p74, %p75
      %p77 = scmp.ne.s32.totalorder %s66, %s67
      %p78 = scmp.eq.s32.totalorder %s20, 0
      %p79 = por %p77, %p78
      %p80 = scmp.ne.s32.totalorder %s66, %s67
      %p81 = scmp.eq.s32.totalorder %s21, 1
      %p82 = por %p80, %p81
      %p84 = scmp.ne.s32.totalorder %s67, %s83
      %p85 = scmp.eq.s32.totalorder %s21, 0
      %p86 = por %p84, %p85
      %s88 = sadd.s32 %s87, 1
      %p91 = scmp.eq.s32.totalorder %s15, 1
      %p92 = scmp.ne.s32.totalorder %s87, %s89
      %p93 = scmp.eq.s32.totalorder %s15, 0
      %p94 = por %p92, %p93
      %p95 = scmp.ne.s32.totalorder %s87, %s89
      %p96 = scmp.eq.s32.totalorder %s20, 1
      %p97 = por %p95, %p96
      %p98 = scmp.ne.s32.totalorder %s89, %s90
      %p99 = scmp.eq.s32.totalorder %s20, 0
      %p100 = por %p98, %p99
      %p101 = scmp.ne.s32.totalorder %s89, %s90
      %p102 = scmp.eq.s32.totalorder %s21, 1
      %p103 = por %p101, %p102
      %p105 = scmp.ne.s32.totalorder %s90, %s104
      %p106 = scmp.eq.s32.totalorder %s21, 0
      %p107 = por %p105, %p106
      %s109 = sadd.s32 %s108, 1
      %p112 = scmp.eq.s32.totalorder %s15, 1
      %p113 = scmp.ne.s32.totalorder %s108, %s110
      %p114 = scmp.eq.s32.totalorder %s15, 0
      %p115 = por %p113, %p114
      %p116 = scmp.ne.s32.totalorder %s108, %s110
      %p117 = scmp.eq.s32.totalorder %s20, 1
      %p118 = por %p116, %p117
      %p119 = scmp.ne.s32.totalorder %s110, %s111
      %p120 = scmp.eq.s32.totalorder %s20, 0
      %p121 = por %p119, %p120
      %p122 = scmp.ne.s32.totalorder %s110, %s111
      %p123 = scmp.eq.s32.totalorder %s21, 1
      %p124 = por %p122, %p123
      %p126 = scmp.ne.s32.totalorder %s111, %s125
      %p127 = scmp.eq.s32.totalorder %s21, 0
      %p128 = por %p126, %p127
      %s130 = sadd.s32 %s129, 1
      %p133 = scmp.eq.s32.totalorder %s15, 1
      %p134 = scmp.ne.s32.totalorder %s129, %s131
      %p135 = scmp.eq.s32.totalorder %s15, 0
      %p136 = por %p134, %p135
      %p137 = scmp.ne.s32.totalorder %s129, %s131
      %p138 = scmp.eq.s32.totalorder %s20, 1
      %p139 = por %p137, %p138
      %p140 = scmp.ne.s32.totalorder %s131, %s132
      %p141 = scmp.eq.s32.totalorder %s20, 0
      %p142 = por %p140, %p141
      %p143 = scmp.ne.s32.totalorder %s131, %s132
      %p144 = scmp.eq.s32.totalorder %s21, 1
      %p145 = por %p143, %p144
      %p147 = scmp.ne.s32.totalorder %s132, %s146
      %p148 = scmp.eq.s32.totalorder %s21, 0
      %p149 = por %p147, %p148
      %s151 = sadd.s32 %s150, 1
      %p154 = scmp.eq.s32.totalorder %s15, 1
      %p155 = scmp.ne.s32.totalorder %s150, %s152
      %p156 = scmp.eq.s32.totalorder %s15, 0
      %p157 = por %p155, %p156
      %p158 = scmp.ne.s32.totalorder %s150, %s152
      %p159 = scmp.eq.s32.totalorder %s20, 1
      %p160 = por %p158, %p159
      %p161 = scmp.ne.s32.totalorder %s152, %s153
      %p162 = scmp.eq.s32.totalorder %s20, 0
      %p163 = por %p161, %p162
      %p164 = scmp.ne.s32.totalorder %s152, %s153
      %p165 = scmp.eq.s32.totalorder %s21, 1
      %p166 = por %p164, %p165
      %p168 = scmp.ne.s32.totalorder %s153, %s167
      %p169 = scmp.eq.s32.totalorder %s21, 0
      %p170 = por %p168, %p169
      %s171 = ssub.s32 %s22, %s34
      %s172 = ssub.s32 %s23, %s30
      %s173 = sor.u32 %s171, %s172
      %p174 = scmp.eq.s32.totalorder %s173, 0
      %s176 = sadd.s32 %s175, 1
      %s177 = scalar_select %p174, %s175, %s176
      %p180 = pneg %p174
      %p181 = scmp.eq.s32.totalorder %s15, 1
      %p182 = por %p180, %p181
      %p183 = scmp.ne.s32.totalorder %s175, %s178
      %p184 = scmp.eq.s32.totalorder %s15, 0
      %p185 = por %p183, %p184
      %p186 = scmp.ne.s32.totalorder %s175, %s178
      %p187 = scmp.eq.s32.totalorder %s20, 1
      %p188 = por %p186, %p187
      %p189 = scmp.ne.s32.totalorder %s178, %s179
      %p190 = scmp.eq.s32.totalorder %s20, 0
      %p191 = por %p189, %p190
      %p192 = scmp.ne.s32.totalorder %s178, %s179
      %p193 = scmp.eq.s32.totalorder %s21, 1
      %p194 = por %p192, %p193
      %p196 = scmp.ne.s32.totalorder %s179, %s195
      %p197 = scmp.eq.s32.totalorder %s21, 0
      %p198 = por %p196, %p197
      %p199 = scmp.le.s32.totalorder 1, %s15
      %p200 = scmp.lt.s32.totalorder %s15, 3
      %p201 = pnand %p199, %p200
      %p202 = pneg %p201
      // Predicated region
      $region9: #{tpu_custom_call.1} parent=5 // pred_check
        _
      $region10: #{tpu_custom_call.1} parent=5 // pred_check_branch
        %204 = sbr.rel (%p201) target = $region12
      $region11: #{tpu_custom_call.1} parent=5 // pred_region
        %s205 = ssub.s32 %s15, 1
        // Predicated region
        $region13: #{tpu_custom_call.1} parent=11 // pred_check
          %p206 = pneg %p53
        $region14: #{tpu_custom_call.1} parent=11 // pred_check_branch
          %208 = sbr.rel (%p206) target = $region16
        $region15: #{tpu_custom_call.1} parent=11 // pred_region
          %s209 = smul.u32 2, %s25
          %p210 = scmp.lt.s32.totalorder %s209, 1
          %s211 = scalar_select %p210, %s209, 1
          %s212 = smul.addr %s211, 8
          %s213 = scalar_lea.vmem %s0, %s212
          %s214 = smul.u32 2, %s25
        $region16: #{tpu_custom_call.1} parent=11 // pred_fallthru
          _
        // Predicated region
        $region17: #{tpu_custom_call.1} parent=11 // pred_check
          %p215 = pneg %p100
        $region18: #{tpu_custom_call.1} parent=11 // pred_check_branch
          %217 = sbr.rel (%p215) target = $region20
        $region19: #{tpu_custom_call.1} parent=11 // pred_region
          _
        $region20: #{tpu_custom_call.1} parent=11 // pred_fallthru
          _
        // Predicated region
        $region21: #{tpu_custom_call.1} parent=11 // pred_check
          %p218 = pneg %p121
        $region22: #{tpu_custom_call.1} parent=11 // pred_check_branch
          %220 = sbr.rel (%p218) target = $region24
        $region23: #{tpu_custom_call.1} parent=11 // pred_region
          _
        $region24: #{tpu_custom_call.1} parent=11 // pred_fallthru
          _
        // Predicated region
        $region25: #{tpu_custom_call.1} parent=11 // pred_check
          %p221 = pneg %p142
        $region26: #{tpu_custom_call.1} parent=11 // pred_check_branch
          %223 = sbr.rel (%p221) target = $region28
        $region27: #{tpu_custom_call.1} parent=11 // pred_region
          _
        $region28: #{tpu_custom_call.1} parent=11 // pred_fallthru
          _
        // Predicated region
        $region29: #{tpu_custom_call.1} parent=11 // pred_check
          %p224 = pneg %p163
        $region30: #{tpu_custom_call.1} parent=11 // pred_check_branch
          %226 = sbr.rel (%p224) target = $region32
        $region31: #{tpu_custom_call.1} parent=11 // pred_region
          _
        $region32: #{tpu_custom_call.1} parent=11 // pred_fallthru
          _
      $region12: #{tpu_custom_call.1} parent=5 // pred_fallthru
        _
      %p227 = scmp.lt.s32.totalorder %s15, 2
      // Predicated region
      $region33: #{tpu_custom_call.1} parent=5 // pred_check
        %p228 = pneg %p227
      $region34: #{tpu_custom_call.1} parent=5 // pred_check_branch
        %230 = sbr.rel (%p228) target = $region36
      $region35: #{tpu_custom_call.1} parent=5 // pred_region
        // Predicated region
        $region37: #{tpu_custom_call.1} parent=35 // pred_check
          %p231 = pneg %p73
        $region38: #{tpu_custom_call.1} parent=35 // pred_check_branch
          %233 = sbr.rel (%p231) target = $region40
        $region39: #{tpu_custom_call.1} parent=35 // pred_region
          %p234 = scmp.lt.s32.totalorder %s22, 1
          %s235 = scalar_select %p234, %s22, 1
          %s236 = smul.addr %s235, 9
          %s237 = smul.addr %s236, 8
          %s238 = scalar_lea.vmem %s1, %s237
        $region40: #{tpu_custom_call.1} parent=35 // pred_fallthru
          _
      $region36: #{tpu_custom_call.1} parent=5 // pred_fallthru
        _
      %p239 = scmp.le.s32.totalorder 1, %s15
      %p240 = scmp.lt.s32.totalorder %s15, 3
      %p241 = pnand %p239, %p240
      %p242 = pneg %p241
      // Predicated region
      $region41: #{tpu_custom_call.1} parent=5 // pred_check
        _
      $region42: #{tpu_custom_call.1} parent=5 // pred_check_branch
        %244 = sbr.rel (%p241) target = $region44
      $region43: #{tpu_custom_call.1} parent=5 // pred_region
        %s245 = ssub.s32 %s15, 1
        %s246 = smul.u32 2, %s25
        %p247 = scmp.lt.s32.totalorder %s246, 1
        %s248 = scalar_select %p247, %s246, 1
        %s249 = smul.addr %s248, 8
        %s250 = scalar_lea.vmem %s0, %s249
        %p251 = pneg %p53
        %p252 = pneg %p50
        %p253 = scmp.lt.s32.totalorder %s24, 1
        %s254 = scalar_select %p253, %s24, 1
        %s255 = smul.addr %s254, 9
        %s256 = smul.addr %s255, 8
        %s257 = scalar_lea.vmem %s1, %s256
        %p258 = pneg %p79
        %p259 = pneg %p76
        %p260 = pneg %p100
        %p261 = pneg %p97
        %p262 = pneg %p121
        %p263 = pneg %p118
        %p264 = pneg %p142
        %p265 = pneg %p139
        %p266 = pneg %p163
        %p267 = pneg %p160
        %p268 = pneg %p191
        %p269 = pneg %p188
        %s270 = sand.u32 %s178, 1
        %s271 = scalar_lea.sflag [#allocation3], %s270
        %s272 = sand.u32 %s178, 1
        %s273 = smul.addr %s272, 16
        %s274 = scalar_lea.vmem [#allocation2], %s273
        %s275 = smul.u32 2, %s25
        %p276 = scmp.lt.s32.totalorder %s275, 1
        %s277 = scalar_select %p276, %s275, 1
        %s278 = smul.addr %s277, 8
        %s279 = scalar_lea.vmem %s0, %s278
        %s280 = smul.u32 2, %s25
        %p281 = scmp.lt.s32.totalorder %s24, 1
        %s282 = scalar_select %p281, %s24, 1
        %s283 = smul.addr %s282, 9
        %s284 = smul.addr %s283, 8
        %s285 = scalar_lea.vmem %s1, %s284
        %s286 = smul.u32 2, %s25
        %v287 = vld [vmem:[%s279] sm:$0xff]
        %v288 = vld [vmem:[%s279 + $0x8] sm:$0xff]
        %v289 = vlaneseq
        %v290 = vand.u32 %v289, 127
        %291 = vset.pattern.permute.xlu0 0
        %292 = vperm.xlu0 %291, %v287
        %v293 = vpop.permute.xlu0 %292
        %294 = vset.pattern.permute.xlu0 0
        %295 = vperm.xlu0 %294, %v288
        %v296 = vpop.permute.xlu0 %295
        %vm297 = vcmp.eq.s32.totalorder %v290, %v293
        %vm298 = vcmp.eq.s32.totalorder %v290, %v296
        %v299 = vsel %vm297, 1, 0
        %v300 = vsel %vm298, 1, 0
        %v301 = vcvt.s32.f32 %v299
        %v302 = vcvt.s32.f32 %v300
        %v303 = vld [vmem:[%s285] sm:$0xff]
        %v304 = vld [vmem:[%s285 + $0x8] sm:$0xff]
        %v305 = vld [vmem:[%s285 + $0x10] sm:$0xff]
        %v306 = vld [vmem:[%s285 + $0x18] sm:$0xff]
        %v307 = vld [vmem:[%s285 + $0x20] sm:$0xff]
        %v308 = vld [vmem:[%s285 + $0x28] sm:$0xff]
        %v309 = vld [vmem:[%s285 + $0x30] sm:$0xff]
        %v310 = vld [vmem:[%s285 + $0x38] sm:$0xff]
        %v311 = vld [vmem:[%s285 + $0x40] sm:$0x1]
        %vm312 = vcmask 531456
        %v314 = vsel %vm312, %v301, 0
        %v317 = vsel %vm312, %v302, 0
        %vm319 = vcmask 1040384
        %v321 = vsel %vm319, %v311, 0
        %323 = vmatpush.msra.mxu0 0.0
        %324 = vmatpush.msra.mxu0 0.0
        %325 = vmatpush.msra.mxu0 0.0
        %326 = vmatpush.msra.mxu0 0.0
        %327 = vmatpush.msra.mxu0 0.0
        %328 = vmatpush.msra.mxu0 0.0
        %329 = vmatpush.msra.mxu0 0.0
        %330 = vmatpush.msra.mxu0 %v321
        %331 = vmatpush.msra.mxu0 %v310
        %332 = vmatpush.msra.mxu0 %v309
        %333 = vmatpush.msra.mxu0 %v308
        %334 = vmatpush.msra.mxu0 %v307
        %335 = vmatpush.msra.mxu0 %v306
        %336 = vmatpush.msra.mxu0 %v305
        %337 = vmatpush.msra.mxu0 %v304
        %338 = vmatpush.msra.mxu0 %v303
        %339 = vmatmul.f32.gmra.mxu0 %v314
        %v340 = vpop.f32.mrf.mxu0
        %v341 = vadd.f32 0.0, %v340
        %342 = vmatmul.f32.gmra.mxu0 %v317
        %v343 = vpop.f32.mrf.mxu0
        %v344 = vadd.f32 0.0, %v343
        %345 = vdwg.mxu0
        %v346 = vld [vmem:[%s2] sm:$0xff]
        %v347 = vld [vmem:[%s2 + $0x8] sm:$0xff]
        %v348 = vld [vmem:[%s2 + $0x10] sm:$0xff]
        %v349 = vld [vmem:[%s2 + $0x18] sm:$0xff]
        %v350 = vld [vmem:[%s3] sm:$0x1]
        %v352 = vperm.slane %v350, 0
        %vm354 = vcmask 261120
        %v356 = vsel %vm354, %v341, 0
        %v359 = vsel %vm354, %v344, 0
        %361 = vmatpush.msra.mxu0 0.0
        %362 = vmatpush.msra.mxu0 0.0
        %363 = vmatpush.msra.mxu0 0.0
        %364 = vmatpush.msra.mxu0 0.0
        %365 = vmatpush.msra.mxu0 0.0
        %366 = vmatpush.msra.mxu0 0.0
        %367 = vmatpush.msra.mxu0 0.0
        %368 = vmatpush.msra.mxu0 0.0
        %369 = vmatpush.msra.mxu0 0.0
        %370 = vmatpush.msra.mxu0 0.0
        %371 = vmatpush.msra.mxu0 0.0
        %372 = vmatpush.msra.mxu0 0.0
        %373 = vmatpush.msra.mxu0 %v349
        %374 = vmatpush.msra.mxu0 %v348
        %375 = vmatpush.msra.mxu0 %v347
        %376 = vmatpush.msra.mxu0 %v346
        %377 = vmatmul.f32.gmra.mxu0 %v356
        %v378 = vpop.f32.mrf.mxu0
        %v379 = vadd.f32 %v352, %v378
        %380 = vmatmul.f32.gmra.mxu0 %v359
        %v381 = vpop.f32.mrf.mxu0
        %v382 = vadd.f32 %v352, %v381
        %383 = vdwg.mxu0
        %v384 = vmax.f32 %v379, 0.0
        %v385 = vmax.f32 %v382, 0.0
        %v386 = vld [vmem:[%s4] sm:$0xff]
        %v387 = vld [vmem:[%s4 + $0x8] sm:$0xff]
        %v388 = vld [vmem:[%s4 + $0x10] sm:$0xff]
        %v389 = vld [vmem:[%s4 + $0x18] sm:$0xff]
        %v390 = vld [vmem:[%s4 + $0x20] sm:$0xff]
        %v391 = vld [vmem:[%s4 + $0x28] sm:$0xff]
        %v392 = vld [vmem:[%s4 + $0x30] sm:$0xff]
        %v393 = vld [vmem:[%s4 + $0x38] sm:$0xff]
        %v394 = vld [vmem:[%s5] sm:$0x1]
        %v396 = vperm.slane %v394, 0
        %vm398 = vcmask 523264
        %v400 = vsel %vm398, %v384, 0
        %v403 = vsel %vm398, %v385, 0
        %405 = vmatpush.msra.mxu0 0.0
        %406 = vmatpush.msra.mxu0 0.0
        %407 = vmatpush.msra.mxu0 0.0
        %408 = vmatpush.msra.mxu0 0.0
        %409 = vmatpush.msra.mxu0 0.0
        %410 = vmatpush.msra.mxu0 0.0
        %411 = vmatpush.msra.mxu0 0.0
        %412 = vmatpush.msra.mxu0 0.0
        %413 = vmatpush.msra.mxu0 %v393
        %414 = vmatpush.msra.mxu0 %v392
        %415 = vmatpush.msra.mxu0 %v391
        %416 = vmatpush.msra.mxu0 %v390
        %417 = vmatpush.msra.mxu0 %v389
        %418 = vmatpush.msra.mxu0 %v388
        %419 = vmatpush.msra.mxu0 %v387
        %420 = vmatpush.msra.mxu0 %v386
        %421 = vmatmul.f32.gmra.mxu0 %v400
        %v422 = vpop.f32.mrf.mxu0
        %v423 = vadd.f32 %v396, %v422
        %424 = vmatmul.f32.gmra.mxu0 %v403
        %v425 = vpop.f32.mrf.mxu0
        %v426 = vadd.f32 %v396, %v425
        %427 = vdwg.mxu0
        %vm428 = vcmask 130048
        %429 = vst.msk [vmem:[%s274] sm:$0xff] %vm428, %v423
        %430 = vst.msk [vmem:[%s274 + $0x8] sm:$0xff] %vm428, %v426
        %s431 = sand.u32 %s178, 1
        %s432 = scalar_lea.sflag [#allocation3], %s431
        %s433 = sand.u32 %s178, 1
        %s434 = smul.addr %s433, 16
        %s435 = scalar_lea.vmem [#allocation2], %s434
        // Predicated region
        $region45: #{tpu_custom_call.1} parent=43 // pred_check
          %p436 = pneg %p188
        $region46: #{tpu_custom_call.1} parent=43 // pred_check_branch
          %438 = sbr.rel (%p436) target = $region48
        $region47: #{tpu_custom_call.1} parent=43 // pred_region
          %s439 = smul.u32 2, %s25
          %441 = vsyncadd %s432, 0
          %s442 = smul.addr %s24, 2
          %s443 = sadd.s32 %s439, %s442
          %s444 = smul.addr %s443, 8
          %s445 = scalar_lea.hbm %s6, %s444
          %s446 = sshll.u32 %s435, 4
          %s447 = int_to_ptr.vmem [resolvable:$true] %s446
          %s448 = sshll.u32 %s445, 4
          %s449 = int_to_ptr.hbm [resolvable:$true] %s448
          %454 = dma.vmem_to_hbm [thread:$0]  %s447, 256, %s449, %s432, 128, 128, 8
        $region48: #{tpu_custom_call.1} parent=43 // pred_fallthru
          _
      $region44: #{tpu_custom_call.1} parent=5 // pred_fallthru
        _
      %p455 = scmp.le.s32.totalorder 2, %s15
      // Predicated region
      $region49: #{tpu_custom_call.1} parent=5 // pred_check
        %p456 = pneg %p455
      $region50: #{tpu_custom_call.1} parent=5 // pred_check_branch
        %458 = sbr.rel (%p456) target = $region52
      $region51: #{tpu_custom_call.1} parent=5 // pred_region
        %s459 = ssub.s32 %s15, 2
        // Predicated region
        $region53: #{tpu_custom_call.1} parent=51 // pred_check
          %p460 = pneg %p194
        $region54: #{tpu_custom_call.1} parent=51 // pred_check_branch
          %462 = sbr.rel (%p460) target = $region56
        $region55: #{tpu_custom_call.1} parent=51 // pred_region
          %s463 = sand.u32 %s179, 1
          %s464 = scalar_lea.sflag [#allocation3], %s463
          %s465 = sand.u32 %s179, 1
          %s466 = smul.addr %s465, 16
          %s467 = scalar_lea.vmem [#allocation2], %s466
          %469 = dma.done %s464, 256
        $region56: #{tpu_custom_call.1} parent=51 // pred_fallthru
          _
      $region52: #{tpu_custom_call.1} parent=5 // pred_fallthru
        _
    $region6: #{tpu_custom_call.1} parent=1 // loop_footer
      %s19 = sadd.s32 1, %s15
    $region7: #{tpu_custom_call.1} parent=1 // loop_footer_branch
      %14 = sbr.rel target = $region3
    $region8: #{tpu_custom_call.1} parent=1 // loop_exit
      _
    %470 = vsyncpa [#allocation3], 1
    %s471 = scalar_lea.sflag [#allocation3], 1
    %472 = vsyncpa %s471, 1

</llo_original>
